<compile_context>
chip_gen: v5e
topology: v5e:2x2
jax: 0.10.0
libtpu: 0.0.40
codegen_flags: <defaults>
</compile_context>

<pallas_src>
import jax
import jax.numpy as jnp
from jax.experimental import pallas as pl
from jax.experimental.pallas import tpu as pltpu


def cnn_kernel(xunf_ref, wconv_ref, bconv_ref, pool_ref, wfc_ref, bfc_ref,
               out_ref):
    # Conv1d (all K taps at once) via im2col matmul; bias folded into init.
    h = jnp.dot(xunf_ref[...], wconv_ref[...],
                preferred_element_type=jnp.float32) + bconv_ref[...]   # (B*S, F)
    h = jnp.maximum(h, 0.0)                                            # ReLU

    # Mean over the sequence (time) axis as an MXU matmul with a
    # block-diagonal (B, B*S) averaging matrix (entries 1/S).
    pooled = jnp.dot(pool_ref[...], h,
                     preferred_element_type=jnp.float32)               # (B, F)

    # Dropout: identity in eval mode.
    # TODO(synk): training-mode dropout via pltpu PRNG if ever needed.

    out = jnp.dot(pooled, wfc_ref[...],
                  preferred_element_type=jnp.float32) + bfc_ref[...]   # (B, O)
    out_ref[...] = out.astype(out_ref.dtype)


@jax.jit
def cnn_model_forward(x, wconv, bconv, wfc, bfc):
    """x: (B, S, CIN) float32.  wconv: (F, CIN, K) torch layout.  Returns (B, O)."""
    B, S, CIN = x.shape
    F, _, K = wconv.shape
    O = wfc.shape[0]
    # PyTorch Conv1d with padding=K//2 only preserves length S for odd K.
    assert K % 2 == 1, "only odd kernel_size is supported (output length == S)"

    pad = K // 2

    # im2col (fused under jit, a few KB): x_unf[b*S+s, t*CIN+c] = x_pad[b, s+t, c]
    # TODO(synk): at large B*S*CIN build the K taps inside the kernel from a
    # halo'd row tile instead of materializing the K-times-larger x_unf.
    x_pad = jnp.pad(x, ((0, 0), (pad, pad), (0, 0)))                    # (B, S+2p, CIN)
    cols = jnp.stack([x_pad[:, t:t + S, :] for t in range(K)], axis=2)  # (B, S, K, CIN)
    x_unf = cols.reshape(B * S, K * CIN)

    # Weight prep (constants at inference; fused under jit).
    wconv2 = jnp.transpose(wconv, (2, 1, 0)).reshape(K * CIN, F)        # (K*CIN, F)
    bconv2 = bconv.reshape(1, F)
    wfc2 = jnp.transpose(wfc, (1, 0))                                   # (F, O)
    bfc2 = bfc.reshape(1, O)

    # Block-diagonal averaging matrix: pool_mat[b, b*S + s] = 1/S.
    row_batch = jnp.repeat(jnp.arange(B), S)                            # (B*S,)
    pool_mat = ((jnp.arange(B)[:, None] == row_batch[None, :])
                .astype(jnp.float32) * (1.0 / S))                       # (B, B*S)

    flops = (2 * (B * S) * (K * CIN) * F       # conv im2col matmul
             + 2 * B * (B * S) * F             # pooling matmul
             + 2 * B * F * O)                  # fc matmul
    bytes_accessed = 4 * (B * S * K * CIN + K * CIN * F + F
                          + B * B * S + F * O + O + B * O)

    vmem_spec = pl.BlockSpec(memory_space=pltpu.MemorySpace.VMEM)

    return pl.pallas_call(
        cnn_kernel,
        out_shape=jax.ShapeDtypeStruct((B, O), jnp.float32),
        in_specs=[vmem_spec] * 6,
        out_specs=vmem_spec,
        cost_estimate=pl.CostEstimate(flops=flops,
                                      transcendentals=0,
                                      bytes_accessed=bytes_accessed),
    )(x_unf, wconv2, bconv2, pool_mat, wfc2, bfc2)


def reference_forward(x, wconv, bconv, wfc, bfc):
    """Pure-JAX reference mirroring the PyTorch module (eval mode)."""
    xc = jnp.transpose(x, (0, 2, 1))                                    # (B, CIN, S)
    K = wconv.shape[-1]
    pad = K // 2
    y = jax.lax.conv_general_dilated(
        xc, wconv, window_strides=(1,), padding=[(pad, pad)],
        dimension_numbers=("NCH", "OIH", "NCH"))
    y = y + bconv[None, :, None]
    y = jnp.maximum(y, 0.0)
    pooled = jnp.mean(y, axis=2)                                        # (B, F)
    return pooled @ wfc.T + bfc


if __name__ == "__main__":
    # Small shapes consistent with the module:
    #   input_size=4, num_filters=32, kernel_size=3, output_size=8
    #   x: (batch=2, seq=8, input_size=4)
    B, S, CIN, F, K, O = 2, 8, 4, 32, 3, 8

    key = jax.random.PRNGKey(0)
    k1, k2, k3, k4, k5 = jax.random.split(key, 5)

    x = jax.random.normal(k1, (B, S, CIN), dtype=jnp.float32)
    wconv = jax.random.normal(k2, (F, CIN, K), dtype=jnp.float32) * 0.2
    bconv = jax.random.normal(k3, (F,), dtype=jnp.float32) * 0.1
    wfc = jax.random.normal(k4, (O, F), dtype=jnp.float32) * 0.2
    bfc = jax.random.normal(k5, (O,), dtype=jnp.float32) * 0.1

    out = cnn_model_forward(x, wconv, bconv, wfc, bfc)
    out = jax.block_until_ready(out)

    ref = reference_forward(x, wconv, bconv, wfc, bfc)
    assert out.shape == (B, O)
    assert jnp.allclose(out, ref, atol=1e-4, rtol=1e-4), (out, ref)

    print("KERNEL_OK")
</pallas_src>

<mosaic_0001>
module attributes {stable_mosaic.version = 11 : i64} {
  func.func @cnn_kernel(%arg0: memref<16x12xf32, #tpu.memory_space<vmem>>, %arg1: memref<12x32xf32, #tpu.memory_space<vmem>>, %arg2: memref<1x32xf32, #tpu.memory_space<vmem>>, %arg3: memref<2x16xf32, #tpu.memory_space<vmem>>, %arg4: memref<32x8xf32, #tpu.memory_space<vmem>>, %arg5: memref<1x8xf32, #tpu.memory_space<vmem>>, %arg6: memref<2x8xf32, #tpu.memory_space<vmem>>) attributes {dimension_semantics = [], scalar_prefetch = 0 : i64, scratch_operands = 0 : i64, tpu.core_type = #tpu.core_type<tc>} {
    %c0 = arith.constant 0 : index
    %c0_0 = arith.constant 0 : index
    %0 = vector.load %arg0[%c0, %c0_0] : memref<16x12xf32, #tpu.memory_space<vmem>>, vector<16x12xf32>
    %c0_1 = arith.constant 0 : index
    %c0_2 = arith.constant 0 : index
    %1 = vector.load %arg1[%c0_1, %c0_2] : memref<12x32xf32, #tpu.memory_space<vmem>>, vector<12x32xf32>
    %cst = arith.constant dense<0.000000e+00> : vector<16x32xf32>
    %2 = tpu.matmul %0, %1, %cst {dimension_numbers = #tpu.dot_dimension_numbers<[1], [0], [0], [1], [0, 0, 1, 1], [], []>} : vector<16x12xf32>, vector<12x32xf32>, vector<16x32xf32> -> vector<16x32xf32>
    %c0_3 = arith.constant 0 : index
    %c0_4 = arith.constant 0 : index
    %3 = vector.load %arg2[%c0_3, %c0_4] : memref<1x32xf32, #tpu.memory_space<vmem>>, vector<1x32xf32>
    %4 = vector.broadcast %3 : vector<1x32xf32> to vector<16x32xf32>
    %5 = arith.addf %2, %4 : vector<16x32xf32>
    %cst_5 = arith.constant 0.000000e+00 : f32
    %6 = vector.broadcast %cst_5 : f32 to vector<16x32xf32>
    %7 = arith.maximumf %5, %6 : vector<16x32xf32>
    %c0_6 = arith.constant 0 : index
    %c0_7 = arith.constant 0 : index
    %8 = vector.load %arg3[%c0_6, %c0_7] : memref<2x16xf32, #tpu.memory_space<vmem>>, vector<2x16xf32>
    %cst_8 = arith.constant dense<0.000000e+00> : vector<2x32xf32>
    %9 = tpu.matmul %8, %7, %cst_8 {dimension_numbers = #tpu.dot_dimension_numbers<[1], [0], [0], [1], [0, 0, 1, 1], [], []>} : vector<2x16xf32>, vector<16x32xf32>, vector<2x32xf32> -> vector<2x32xf32>
    %c0_9 = arith.constant 0 : index
    %c0_10 = arith.constant 0 : index
    %10 = vector.load %arg4[%c0_9, %c0_10] : memref<32x8xf32, #tpu.memory_space<vmem>>, vector<32x8xf32>
    %cst_11 = arith.constant dense<0.000000e+00> : vector<2x8xf32>
    %11 = tpu.matmul %9, %10, %cst_11 {dimension_numbers = #tpu.dot_dimension_numbers<[1], [0], [0], [1], [0, 0, 1, 1], [], []>} : vector<2x32xf32>, vector<32x8xf32>, vector<2x8xf32> -> vector<2x8xf32>
    %c0_12 = arith.constant 0 : index
    %c0_13 = arith.constant 0 : index
    %12 = vector.load %arg5[%c0_12, %c0_13] : memref<1x8xf32, #tpu.memory_space<vmem>>, vector<1x8xf32>
    %13 = vector.broadcast %12 : vector<1x8xf32> to vector<2x8xf32>
    %14 = arith.addf %11, %13 : vector<2x8xf32>
    %c0_14 = arith.constant 0 : index
    %c0_15 = arith.constant 0 : index
    %15 = vector.load %arg6[%c0_14, %c0_15] : memref<2x8xf32, #tpu.memory_space<vmem>>, vector<2x8xf32>
    tpu.vector_store %arg6[%c0_14, %c0_15], %14 {strides = array<i32>} : memref<2x8xf32, #tpu.memory_space<vmem>>, vector<2x8xf32>,
    return
  }
}

</mosaic_0001>

<llo_original>
// kernel: eq.11
$region0: #{eq.11}
  %s0 = inlined_call_operand.vmem [shape: s32[2,8], index: 0, kind: input, shape index: {}]
  %s1 = inlined_call_operand.vmem [shape: s32[16], index: 1, kind: output, shape index: {}]
  $region1: #{eq.11} parent=0
    #allocation0 [shape = 'u8[4096]{0}', space=vmem, size = 0x1000, scoped, tag = 'scoped mem for output reshape']
    #allocation1 [shape = 'u8[4096]{0}', space=vmem, size = 0x1000, scoped, tag = 'scoped mem for input reshape']
    %s3 = ssub.s32 4, 1
    %v4 = vld [vmem:[%s0] sm:%s3]
    %5 = vst [vmem:[#allocation1] sm:%s3] %v4
    %v6 = vld [vmem:[#allocation1] sm:$0x1]
    %vm7 = vcmask 64512
    %8 = vst.msk [vmem:[#allocation0] sm:$0x1] %vm7, %v6
    %s9 = scalar_lea.vmem [#allocation1], 1
    %v10 = vld [vmem:[%s9] sm:$0x1]
    %11 = vrot.lane.b32.xlu0 %v10, 8
    %v12 = vpop.permute.xlu0 %11
    %vm13 = vcmask 130112
    %14 = vst.msk [vmem:[#allocation0] sm:$0x1] %vm13, %v12
    %s16 = ssub.s32 2, 1
    %v17 = vld [vmem:[#allocation0] sm:%s16]
    %s19 = ssub.s32 2, 1
    %20 = vst [vmem:[%s1] sm:%s19] %v17

// kernel: cnn_model_forward.1
$region0: #{cnn_model_forward.1}
  #allocation0 [shape = 'u32[]', space=smem, size = 0x4, offset = 0x4, fixed_abs, tag = 'smem constant byte address 0x4 - core index']
  #allocation1 [shape = 'u32[72,128]{1,0:T(1,128)}', space=vmem, size = 0x9000, scoped, tag = 'internal scratch']
  %s0 = inlined_call_operand.vmem [shape: f32[16,12], index: 0, kind: input, shape index: {}]
  %s1 = inlined_call_operand.vmem [shape: f32[12,32], index: 1, kind: input, shape index: {}]
  %s2 = inlined_call_operand.vmem [shape: f32[1,32], index: 2, kind: input, shape index: {}]
  %s3 = inlined_call_operand.vmem [shape: f32[2,16], index: 3, kind: input, shape index: {}]
  %s4 = inlined_call_operand.vmem [shape: f32[32,8], index: 4, kind: input, shape index: {}]
  %s5 = inlined_call_operand.vmem [shape: f32[1,8], index: 5, kind: input, shape index: {}]
  %s6 = inlined_call_operand.hbm [shape: f32[2,8], index: 6, kind: output, shape index: {}]
  %s7 = sld [smem:[#allocation0]]
  $region34: #{cnn_model_forward.1} parent=0
    _
  %s9 = ssub.s32 1, %s7
  %s10 = scalar_select 0, %s9, %s7
  $region1: #{cnn_model_forward.1} parent=0
    #allocation2 [shape = 'u8[1024]{0}', space=vmem, size = 0x400, scoped, tag = 'output window, operand 0, single buffered']
    #allocation3 [shape = 's32[1]{0}', space=sflag, size = 0x4, scoped, tag = 'scoped memory for cnn_model_forward.1']
    %11 = vsyncpa [#allocation3], 0
    // Predicated region
    $region2: #{cnn_model_forward.1} parent=1 // pred_check
      _
    $region3: #{cnn_model_forward.1} parent=1 // pred_check_branch
      %13 = sbr.rel (0) target = $region5
    $region4: #{cnn_model_forward.1} parent=1 // pred_region
      _
    $region5: #{cnn_model_forward.1} parent=1 // pred_fallthru
      _
    // Predicated region
    $region6: #{cnn_model_forward.1} parent=1 // pred_check
      _
    $region7: #{cnn_model_forward.1} parent=1 // pred_check_branch
      %15 = sbr.rel (0) target = $region9
    $region8: #{cnn_model_forward.1} parent=1 // pred_region
      _
    $region9: #{cnn_model_forward.1} parent=1 // pred_fallthru
      _
    // Predicated region
    $region10: #{cnn_model_forward.1} parent=1 // pred_check
      _
    $region11: #{cnn_model_forward.1} parent=1 // pred_check_branch
      %17 = sbr.rel (0) target = $region13
    $region12: #{cnn_model_forward.1} parent=1 // pred_region
      _
    $region13: #{cnn_model_forward.1} parent=1 // pred_fallthru
      _
    // Predicated region
    $region14: #{cnn_model_forward.1} parent=1 // pred_check
      _
    $region15: #{cnn_model_forward.1} parent=1 // pred_check_branch
      %19 = sbr.rel (0) target = $region17
    $region16: #{cnn_model_forward.1} parent=1 // pred_region
      _
    $region17: #{cnn_model_forward.1} parent=1 // pred_fallthru
      _
    // Predicated region
    $region18: #{cnn_model_forward.1} parent=1 // pred_check
      _
    $region19: #{cnn_model_forward.1} parent=1 // pred_check_branch
      %21 = sbr.rel (0) target = $region21
    $region20: #{cnn_model_forward.1} parent=1 // pred_region
      _
    $region21: #{cnn_model_forward.1} parent=1 // pred_fallthru
      _
    // Predicated region
    $region22: #{cnn_model_forward.1} parent=1 // pred_check
      _
    $region23: #{cnn_model_forward.1} parent=1 // pred_check_branch
      %23 = sbr.rel (0) target = $region25
    $region24: #{cnn_model_forward.1} parent=1 // pred_region
      _
    $region25: #{cnn_model_forward.1} parent=1 // pred_fallthru
      _
    %v24 = vld [vmem:[%s0] sm:$0xff]
    %v25 = vld [vmem:[%s0 + $0x8] sm:$0xff]
    %v26 = vld [vmem:[%s1] sm:$0xff]
    %v27 = vld [vmem:[%s1 + $0x8] sm:$0xf]
    %v28 = vld [vmem:[%s2] sm:$0x1]
    %v30 = vperm.slane %v28, 0
    %vm32 = vcmask 97280
    %v34 = vsel %vm32, %v24, 0
    %v37 = vsel %vm32, %v25, 0
    %vm39 = vcmask 1043456
    %v41 = vsel %vm39, %v27, 0
    %43 = vmatpush.msra.mxu0 0.0
    %44 = vmatpush.msra.mxu0 0.0
    %45 = vmatpush.msra.mxu0 0.0
    %46 = vmatpush.msra.mxu0 0.0
    %47 = vmatpush.msra.mxu0 0.0
    %48 = vmatpush.msra.mxu0 0.0
    %49 = vmatpush.msra.mxu0 0.0
    %50 = vmatpush.msra.mxu0 0.0
    %51 = vmatpush.msra.mxu0 0.0
    %52 = vmatpush.msra.mxu0 0.0
    %53 = vmatpush.msra.mxu0 0.0
    %54 = vmatpush.msra.mxu0 0.0
    %55 = vmatpush.msra.mxu0 0.0
    %56 = vmatpush.msra.mxu0 0.0
    %57 = vmatpush.msra.mxu0 %v41
    %58 = vmatpush.msra.mxu0 %v26
    %59 = vmatmul.f32.gmra.mxu0 %v34
    %v60 = vpop.f32.mrf.mxu0
    %v61 = vadd.f32 %v30, %v60
    %62 = vmatmul.f32.gmra.mxu0 %v37
    %v63 = vpop.f32.mrf.mxu0
    %v64 = vadd.f32 %v30, %v63
    %65 = vdwg.mxu0
    %v66 = vmax.f32 %v61, 0.0
    %v67 = vmax.f32 %v64, 0.0
    %v68 = vld [vmem:[%s3] sm:$0x3]
    %vm69 = vcmask 130048
    %v71 = vsel %vm69, %v68, 0
    %73 = vmatpush.msra.mxu0 0.0
    %74 = vmatpush.msra.mxu0 0.0
    %75 = vmatpush.msra.mxu0 0.0
    %76 = vmatpush.msra.mxu0 0.0
    %77 = vmatpush.msra.mxu0 0.0
    %78 = vmatpush.msra.mxu0 0.0
    %79 = vmatpush.msra.mxu0 0.0
    %80 = vmatpush.msra.mxu0 0.0
    %81 = vmatpush.msra.mxu0 0.0
    %82 = vmatpush.msra.mxu0 0.0
    %83 = vmatpush.msra.mxu0 0.0
    %84 = vmatpush.msra.mxu0 0.0
    %85 = vmatpush.msra.mxu0 0.0
    %86 = vmatpush.msra.mxu0 0.0
    %87 = vmatpush.msra.mxu0 %v67
    %88 = vmatpush.msra.mxu0 %v66
    %89 = vmatmul.f32.gmra.mxu0 %v71
    %v90 = vpop.f32.mrf.mxu0
    %v91 = vadd.f32 0.0, %v90
    %92 = vdwg.mxu0
    %v93 = vld [vmem:[%s4] sm:$0xff]
    %v94 = vld [vmem:[%s4 + $0x8] sm:$0xff]
    %v95 = vld [vmem:[%s4 + $0x10] sm:$0xff]
    %v96 = vld [vmem:[%s4 + $0x18] sm:$0xff]
    %v97 = vld [vmem:[%s5] sm:$0x1]
    %v99 = vperm.slane %v97, 0
    %vm101 = vcmask 261120
    %v103 = vsel %vm101, %v91, 0
    %105 = vmatpush.msra.mxu0 0.0
    %106 = vmatpush.msra.mxu0 0.0
    %107 = vmatpush.msra.mxu0 0.0
    %108 = vmatpush.msra.mxu0 0.0
    %109 = vmatpush.msra.mxu0 0.0
    %110 = vmatpush.msra.mxu0 0.0
    %111 = vmatpush.msra.mxu0 0.0
    %112 = vmatpush.msra.mxu0 0.0
    %113 = vmatpush.msra.mxu0 0.0
    %114 = vmatpush.msra.mxu0 0.0
    %115 = vmatpush.msra.mxu0 0.0
    %116 = vmatpush.msra.mxu0 0.0
    %117 = vmatpush.msra.mxu0 %v96
    %118 = vmatpush.msra.mxu0 %v95
    %119 = vmatpush.msra.mxu0 %v94
    %120 = vmatpush.msra.mxu0 %v93
    %121 = vmatmul.f32.gmra.mxu0 %v103
    %v122 = vpop.f32.mrf.mxu0
    %v123 = vadd.f32 %v99, %v122
    %124 = vdwg.mxu0
    %vm125 = vcmask 58368
    %126 = vst.msk [vmem:[#allocation2] sm:$0x3] %vm125, %v123
    // Predicated region
    $region26: #{cnn_model_forward.1} parent=1 // pred_check
      _
    $region27: #{cnn_model_forward.1} parent=1 // pred_check_branch
      %128 = sbr.rel (0) target = $region29
    $region28: #{cnn_model_forward.1} parent=1 // pred_region
      %130 = vsyncadd [#allocation3], 0
      %s132 = sshll.u32 [#allocation2], 4
      %s133 = int_to_ptr.vmem [resolvable:$true] %s132
      %s134 = sshll.u32 %s6, 4
      %s135 = int_to_ptr.hbm [resolvable:$true] %s134
      %137 = dma.vmem_to_hbm [thread:$0]  %s133, 32, %s135, [#allocation3]
    $region29: #{cnn_model_forward.1} parent=1 // pred_fallthru
      _
    // Predicated region
    $region30: #{cnn_model_forward.1} parent=1 // pred_check
      _
    $region31: #{cnn_model_forward.1} parent=1 // pred_check_branch
      %139 = sbr.rel (0) target = $region33
    $region32: #{cnn_model_forward.1} parent=1 // pred_region
      %141 = dma.done [#allocation3], 32
    $region33: #{cnn_model_forward.1} parent=1 // pred_fallthru
      _
    %142 = vsyncpa [#allocation3], 1

</llo_original>
